<compile_context>
chip_gen: v7x
topology: tpu7x:2x2x1
jax: 0.10.0
libtpu: 0.0.40
codegen_flags: <defaults>
</compile_context>

<pallas_src>
import functools

import numpy as np
import jax
import jax.numpy as jnp
from jax.experimental import pallas as pl
from jax.experimental.pallas import tpu as pltpu

_VMEM_WORKING_SET_BYTES = 40 * 1024 * 1024   # per-step working set target (fits v7x)
_VMEM_LIMIT_BYTES = 48 * 1024 * 1024         # explicit scoped-VMEM limit (<= v7x 64 MiB)
_UNROLL_MAX = 32                             # fully unroll the frame loop up to this


def _ola_kernel(x_ref, inv_ref, o_ref, acc_ref, *, nframes, frame_size, frame_shift):
    """One row-block of overlap-and-add.

    x_ref  : (nb, nframes*frame_size)  VMEM  input frames (flattened per row)
    inv_ref: (1, sig_length)           VMEM  f32 reciprocal overlap counts
    o_ref  : (nb, sig_length)          VMEM  output signal (written exactly once)
    acc_ref: (nb, sig_length)          VMEM  f32 scratch accumulator
    """
    acc_ref[...] = jnp.zeros(acc_ref.shape, jnp.float32)

    if nframes <= _UNROLL_MAX:
        # Small static frame count: unrolled lane-aligned slice adds.
        for i in range(nframes):
            s = i * frame_shift
            acc_ref[:, s:s + frame_size] += (
                x_ref[:, i * frame_size:(i + 1) * frame_size].astype(jnp.float32))
    else:
        # Large frame count: keep code size bounded with a fori_loop.
        def body(i, carry):
            src = x_ref[:, pl.ds(pl.multiple_of(i * frame_size, frame_size), frame_size)]
            dst = pl.ds(pl.multiple_of(i * frame_shift, frame_shift), frame_size)
            acc_ref[:, dst] += src.astype(jnp.float32)
            return carry
        jax.lax.fori_loop(0, nframes, body, 0, unroll=4)

    # Single fused store: scale by precomputed reciprocal counts and cast.
    o_ref[...] = (acc_ref[...] * inv_ref[...]).astype(o_ref.dtype)


def _pick_row_block(n_rows, nframes, frame_size, sig_length, itemsize):
    """Largest sublane-aligned row block that fits the VMEM budget."""
    row_align = 8 if itemsize >= 4 else 16
    flat = nframes * frame_size
    # 2x input (double buffered) + 2x output (double buffered) + 1x f32 scratch.
    bytes_per_row = 2 * flat * itemsize + 2 * sig_length * itemsize + 4 * sig_length
    # TODO(synk): for very long signals where even `row_align` rows exceed the VMEM
    # budget, the frame/signal axis would also need tiling; not implemented here.
    max_rows = max(row_align, int(_VMEM_WORKING_SET_BYTES // max(bytes_per_row, 1)))
    if n_rows >= 2 * row_align:
        # Keep at least 2 grid steps so v7x can shard rows across both TensorCores.
        half = -(-n_rows // 2)
        half = -(-half // row_align) * row_align
        max_rows = min(max_rows, half)
    if max_rows >= n_rows:
        return n_rows
    return max(row_align, (max_rows // row_align) * row_align)


def torch_ola(inputs, frame_shift=256):
    """Pallas-backed TorchOLA.forward for inputs of shape (..., nframes, frame_size)."""
    *lead, nframes, frame_size = inputs.shape
    n_rows = int(np.prod(lead)) if lead else 1
    sig_length = (nframes - 1) * frame_shift + frame_size
    flat = nframes * frame_size

    # Metadata-only reshape (merges contiguous trailing dims): no extra HBM pass.
    x = inputs.reshape(n_rows, flat)

    itemsize = np.dtype(inputs.dtype).itemsize
    nb = _pick_row_block(n_rows, nframes, frame_size, sig_length, itemsize)
    grid = (pl.cdiv(n_rows, nb),)

    # Static reciprocal overlap counts ("1 / ones" of the PyTorch code).
    counts = np.zeros((1, sig_length), np.float32)
    for i in range(nframes):
        counts[0, i * frame_shift:i * frame_shift + frame_size] += 1.0
    with np.errstate(divide="ignore"):
        counts_inv = jnp.asarray((1.0 / counts).astype(np.float32))

    kern = functools.partial(_ola_kernel, nframes=nframes,
                             frame_size=frame_size, frame_shift=frame_shift)
    out = pl.pallas_call(
        kern,
        out_shape=jax.ShapeDtypeStruct((n_rows, sig_length), inputs.dtype),
        grid=grid,
        in_specs=[
            pl.BlockSpec((nb, flat), lambda r: (r, 0)),
            pl.BlockSpec((1, sig_length), lambda r: (0, 0)),
        ],
        out_specs=pl.BlockSpec((nb, sig_length), lambda r: (r, 0)),
        scratch_shapes=[pltpu.VMEM((nb, sig_length), jnp.float32)],
        compiler_params=pltpu.CompilerParams(
            dimension_semantics=("parallel",),
            vmem_limit_bytes=_VMEM_LIMIT_BYTES),
    )(x, counts_inv)

    return out.reshape(*lead, sig_length)


def ola_reference(inputs, frame_shift=256):
    """Pure-JAX mirror of TorchOLA.forward for correctness checking."""
    nframes, frame_size = inputs.shape[-2], inputs.shape[-1]
    sig_length = (nframes - 1) * frame_shift + frame_size
    sig = jnp.zeros(inputs.shape[:-2] + (sig_length,), inputs.dtype)
    ones = jnp.zeros_like(sig)
    for i in range(nframes):
        s = i * frame_shift
        sig = sig.at[..., s:s + frame_size].add(inputs[..., i, :])
        ones = ones.at[..., s:s + frame_size].add(1.0)
    return sig / ones


if __name__ == "__main__":
    key = jax.random.PRNGKey(0)
    k1, k2, k3 = jax.random.split(key, 3)

    def run_case(k, shape, frame_shift):
        x = jax.random.normal(k, shape, jnp.float32)
        fwd = jax.jit(functools.partial(torch_ola, frame_shift=frame_shift))
        out = jax.block_until_ready(fwd(x))
        ref = jax.block_until_ready(ola_reference(x, frame_shift))
        nframes, frame_size = shape[-2], shape[-1]
        sig_length = (nframes - 1) * frame_shift + frame_size
        assert out.shape == shape[:-2] + (sig_length,), out.shape
        np.testing.assert_allclose(np.asarray(out), np.asarray(ref),
                                   rtol=1e-6, atol=1e-6)

    # 50% overlap, single full row block.
    run_case(k1, (3, 4, 8, 256), 128)
    # More rows: multi-step grid with a partial last row block (no pad/slice copies).
    run_case(k2, (2, 9, 8, 256), 128)
    # frame_shift > frame_size: gaps -> 0/0 -> NaN, matching torch.
    run_case(k3, (2, 2, 4, 128), 256)

    print("KERNEL_OK")
</pallas_src>

<mosaic_0001>
module attributes {stable_mosaic.version = 11 : i64} {
  func.func @_ola_kernel(%arg0: i32, %arg1: memref<12x2048xf32, #tpu.memory_space<vmem>>, %arg2: memref<1x1152xf32, #tpu.memory_space<vmem>>, %arg3: memref<12x1152xf32, #tpu.memory_space<vmem>>, %arg4: memref<12x1152xf32, #tpu.memory_space<vmem>>) attributes {dimension_semantics = [#tpu.dimension_semantics<parallel>], iteration_bounds = array<i64: 1>, scalar_prefetch = 0 : i64, scratch_operands = 1 : i64, tpu.core_type = #tpu.core_type<tc>, window_params = [{transform_indices = @transform_0, window_bounds = array<i64: 12, 2048>}, {pipeline_mode = #tpu.pipeline_mode<synchronous>, transform_indices = @transform_1, window_bounds = array<i64: 1, 1152>}, {transform_indices = @transform_2, window_bounds = array<i64: 12, 1152>}]} {
    %cst = arith.constant 0.000000e+00 : f32
    %0 = vector.broadcast %cst : f32 to vector<12x1152xf32>
    %c0 = arith.constant 0 : index
    %c0_0 = arith.constant 0 : index
    %1 = vector.load %arg4[%c0, %c0_0] : memref<12x1152xf32, #tpu.memory_space<vmem>>, vector<12x1152xf32>
    tpu.vector_store %arg4[%c0, %c0_0], %0 {strides = array<i32>} : memref<12x1152xf32, #tpu.memory_space<vmem>>, vector<12x1152xf32>,
    %c0_1 = arith.constant 0 : index
    %c0_2 = arith.constant 0 : index
    %2 = vector.load %arg4[%c0_1, %c0_2] : memref<12x1152xf32, #tpu.memory_space<vmem>>, vector<12x256xf32>
    %c0_3 = arith.constant 0 : index
    %c0_4 = arith.constant 0 : index
    %3 = vector.load %arg1[%c0_3, %c0_4] : memref<12x2048xf32, #tpu.memory_space<vmem>>, vector<12x256xf32>
    %4 = arith.addf %2, %3 : vector<12x256xf32>
    %c0_5 = arith.constant 0 : index
    %c0_6 = arith.constant 0 : index
    %5 = vector.load %arg4[%c0_5, %c0_6] : memref<12x1152xf32, #tpu.memory_space<vmem>>, vector<12x256xf32>
    tpu.vector_store %arg4[%c0_5, %c0_6], %4 {strides = array<i32>} : memref<12x1152xf32, #tpu.memory_space<vmem>>, vector<12x256xf32>,
    %c0_7 = arith.constant 0 : index
    %c128 = arith.constant 128 : index
    %6 = vector.load %arg4[%c0_7, %c128] : memref<12x1152xf32, #tpu.memory_space<vmem>>, vector<12x256xf32>
    %c0_8 = arith.constant 0 : index
    %c256 = arith.constant 256 : index
    %7 = vector.load %arg1[%c0_8, %c256] : memref<12x2048xf32, #tpu.memory_space<vmem>>, vector<12x256xf32>
    %8 = arith.addf %6, %7 : vector<12x256xf32>
    %c0_9 = arith.constant 0 : index
    %c128_10 = arith.constant 128 : index
    %9 = vector.load %arg4[%c0_9, %c128_10] : memref<12x1152xf32, #tpu.memory_space<vmem>>, vector<12x256xf32>
    tpu.vector_store %arg4[%c0_9, %c128_10], %8 {strides = array<i32>} : memref<12x1152xf32, #tpu.memory_space<vmem>>, vector<12x256xf32>,
    %c0_11 = arith.constant 0 : index
    %c256_12 = arith.constant 256 : index
    %10 = vector.load %arg4[%c0_11, %c256_12] : memref<12x1152xf32, #tpu.memory_space<vmem>>, vector<12x256xf32>
    %c0_13 = arith.constant 0 : index
    %c512 = arith.constant 512 : index
    %11 = vector.load %arg1[%c0_13, %c512] : memref<12x2048xf32, #tpu.memory_space<vmem>>, vector<12x256xf32>
    %12 = arith.addf %10, %11 : vector<12x256xf32>
    %c0_14 = arith.constant 0 : index
    %c256_15 = arith.constant 256 : index
    %13 = vector.load %arg4[%c0_14, %c256_15] : memref<12x1152xf32, #tpu.memory_space<vmem>>, vector<12x256xf32>
    tpu.vector_store %arg4[%c0_14, %c256_15], %12 {strides = array<i32>} : memref<12x1152xf32, #tpu.memory_space<vmem>>, vector<12x256xf32>,
    %c0_16 = arith.constant 0 : index
    %c384 = arith.constant 384 : index
    %14 = vector.load %arg4[%c0_16, %c384] : memref<12x1152xf32, #tpu.memory_space<vmem>>, vector<12x256xf32>
    %c0_17 = arith.constant 0 : index
    %c768 = arith.constant 768 : index
    %15 = vector.load %arg1[%c0_17, %c768] : memref<12x2048xf32, #tpu.memory_space<vmem>>, vector<12x256xf32>
    %16 = arith.addf %14, %15 : vector<12x256xf32>
    %c0_18 = arith.constant 0 : index
    %c384_19 = arith.constant 384 : index
    %17 = vector.load %arg4[%c0_18, %c384_19] : memref<12x1152xf32, #tpu.memory_space<vmem>>, vector<12x256xf32>
    tpu.vector_store %arg4[%c0_18, %c384_19], %16 {strides = array<i32>} : memref<12x1152xf32, #tpu.memory_space<vmem>>, vector<12x256xf32>,
    %c0_20 = arith.constant 0 : index
    %c512_21 = arith.constant 512 : index
    %18 = vector.load %arg4[%c0_20, %c512_21] : memref<12x1152xf32, #tpu.memory_space<vmem>>, vector<12x256xf32>
    %c0_22 = arith.constant 0 : index
    %c1024 = arith.constant 1024 : index
    %19 = vector.load %arg1[%c0_22, %c1024] : memref<12x2048xf32, #tpu.memory_space<vmem>>, vector<12x256xf32>
    %20 = arith.addf %18, %19 : vector<12x256xf32>
    %c0_23 = arith.constant 0 : index
    %c512_24 = arith.constant 512 : index
    %21 = vector.load %arg4[%c0_23, %c512_24] : memref<12x1152xf32, #tpu.memory_space<vmem>>, vector<12x256xf32>
    tpu.vector_store %arg4[%c0_23, %c512_24], %20 {strides = array<i32>} : memref<12x1152xf32, #tpu.memory_space<vmem>>, vector<12x256xf32>,
    %c0_25 = arith.constant 0 : index
    %c640 = arith.constant 640 : index
    %22 = vector.load %arg4[%c0_25, %c640] : memref<12x1152xf32, #tpu.memory_space<vmem>>, vector<12x256xf32>
    %c0_26 = arith.constant 0 : index
    %c1280 = arith.constant 1280 : index
    %23 = vector.load %arg1[%c0_26, %c1280] : memref<12x2048xf32, #tpu.memory_space<vmem>>, vector<12x256xf32>
    %24 = arith.addf %22, %23 : vector<12x256xf32>
    %c0_27 = arith.constant 0 : index
    %c640_28 = arith.constant 640 : index
    %25 = vector.load %arg4[%c0_27, %c640_28] : memref<12x1152xf32, #tpu.memory_space<vmem>>, vector<12x256xf32>
    tpu.vector_store %arg4[%c0_27, %c640_28], %24 {strides = array<i32>} : memref<12x1152xf32, #tpu.memory_space<vmem>>, vector<12x256xf32>,
    %c0_29 = arith.constant 0 : index
    %c768_30 = arith.constant 768 : index
    %26 = vector.load %arg4[%c0_29, %c768_30] : memref<12x1152xf32, #tpu.memory_space<vmem>>, vector<12x256xf32>
    %c0_31 = arith.constant 0 : index
    %c1536 = arith.constant 1536 : index
    %27 = vector.load %arg1[%c0_31, %c1536] : memref<12x2048xf32, #tpu.memory_space<vmem>>, vector<12x256xf32>
    %28 = arith.addf %26, %27 : vector<12x256xf32>
    %c0_32 = arith.constant 0 : index
    %c768_33 = arith.constant 768 : index
    %29 = vector.load %arg4[%c0_32, %c768_33] : memref<12x1152xf32, #tpu.memory_space<vmem>>, vector<12x256xf32>
    tpu.vector_store %arg4[%c0_32, %c768_33], %28 {strides = array<i32>} : memref<12x1152xf32, #tpu.memory_space<vmem>>, vector<12x256xf32>,
    %c0_34 = arith.constant 0 : index
    %c896 = arith.constant 896 : index
    %30 = vector.load %arg4[%c0_34, %c896] : memref<12x1152xf32, #tpu.memory_space<vmem>>, vector<12x256xf32>
    %c0_35 = arith.constant 0 : index
    %c1792 = arith.constant 1792 : index
    %31 = vector.load %arg1[%c0_35, %c1792] : memref<12x2048xf32, #tpu.memory_space<vmem>>, vector<12x256xf32>
    %32 = arith.addf %30, %31 : vector<12x256xf32>
    %c0_36 = arith.constant 0 : index
    %c896_37 = arith.constant 896 : index
    %33 = vector.load %arg4[%c0_36, %c896_37] : memref<12x1152xf32, #tpu.memory_space<vmem>>, vector<12x256xf32>
    tpu.vector_store %arg4[%c0_36, %c896_37], %32 {strides = array<i32>} : memref<12x1152xf32, #tpu.memory_space<vmem>>, vector<12x256xf32>,
    %c0_38 = arith.constant 0 : index
    %c0_39 = arith.constant 0 : index
    %34 = vector.load %arg4[%c0_38, %c0_39] : memref<12x1152xf32, #tpu.memory_space<vmem>>, vector<12x1152xf32>
    %c0_40 = arith.constant 0 : index
    %c0_41 = arith.constant 0 : index
    %35 = vector.load %arg2[%c0_40, %c0_41] : memref<1x1152xf32, #tpu.memory_space<vmem>>, vector<1x1152xf32>
    %36 = vector.broadcast %35 : vector<1x1152xf32> to vector<12x1152xf32>
    %37 = arith.mulf %34, %36 : vector<12x1152xf32>
    %c0_42 = arith.constant 0 : index
    %c0_43 = arith.constant 0 : index
    %38 = vector.load %arg3[%c0_42, %c0_43] : memref<12x1152xf32, #tpu.memory_space<vmem>>, vector<12x1152xf32>
    tpu.vector_store %arg3[%c0_42, %c0_43], %37 {strides = array<i32>} : memref<12x1152xf32, #tpu.memory_space<vmem>>, vector<12x1152xf32>,
    return
  }
  func.func @transform_0(%arg0: i32) -> (i32, i32) {
    %c0_i32 = arith.constant 0 : i32
    %c0_i32_0 = arith.constant 0 : i32
    return %arg0, %c0_i32 : i32, i32
  }
  func.func @transform_1(%arg0: i32) -> (i32, i32) {
    %c0_i32 = arith.constant 0 : i32
    %c0_i32_0 = arith.constant 0 : i32
    %c0_i32_1 = arith.constant 0 : i32
    return %c0_i32, %c0_i32_0 : i32, i32
  }
  func.func @transform_2(%arg0: i32) -> (i32, i32) {
    %c0_i32 = arith.constant 0 : i32
    %c0_i32_0 = arith.constant 0 : i32
    return %arg0, %c0_i32 : i32, i32
  }
}

</mosaic_0001>

<llo_original>
// kernel: torch_ola.1
$region0: #{torch_ola.1}
  #allocation0 [shape = 'u32[]', space=smem, size = 0x4, offset = 0x4, fixed_abs, tag = 'smem constant byte address 0x4 - core index']
  #allocation1 [shape = 'u32[144,128]{1,0:T(1,128)}', space=vmem, size = 0x12000, scoped, tag = 'internal scratch']
  #allocation2 [shape = 'f32[12,1152]{1,0:T(8,128)}', space=vmem, size = 0x12000, scoped, tag = 'scratch operand']
  %s0 = inlined_call_operand.vmem [shape: f32[12,2048], index: 0, kind: input, shape index: {}]
  %s1 = inlined_call_operand.vmem [shape: f32[1,1152], index: 1, kind: input, shape index: {}]
  %s2 = inlined_call_operand.vmem [shape: f32[12,1152], index: 2, kind: output, shape index: {}]
  %s3 = sld [smem:[#allocation0]]
  $region18: #{torch_ola.1} parent=0
    _
  %s5 = ssub.s32 1, %s3
  %s6 = scalar_select 0, %s5, %s3
  // Predicated region
  $region2: #{torch_ola.1} parent=0 // pred_check
    _
  $region3: #{torch_ola.1} parent=0 // pred_check_branch
    %8 = sbr.rel (0) target = $region5
  $region4: #{torch_ola.1} parent=0 // pred_region
    _
  $region5: #{torch_ola.1} parent=0 // pred_fallthru
    _
  // Predicated region
  $region6: #{torch_ola.1} parent=0 // pred_check
    _
  $region7: #{torch_ola.1} parent=0 // pred_check_branch
    %10 = sbr.rel (0) target = $region9
  $region8: #{torch_ola.1} parent=0 // pred_region
    _
  $region9: #{torch_ola.1} parent=0 // pred_fallthru
    _
  %11 = vst [vmem:[#allocation2] sm:$0xff] 0.0
  %12 = vst [vmem:[#allocation2 + $0x8] sm:$0xff] 0.0
  %13 = vst [vmem:[#allocation2 + $0x10] sm:$0xff] 0.0
  %14 = vst [vmem:[#allocation2 + $0x18] sm:$0xff] 0.0
  %15 = vst [vmem:[#allocation2 + $0x20] sm:$0xff] 0.0
  %16 = vst [vmem:[#allocation2 + $0x28] sm:$0xff] 0.0
  %17 = vst [vmem:[#allocation2 + $0x30] sm:$0xff] 0.0
  %18 = vst [vmem:[#allocation2 + $0x38] sm:$0xff] 0.0
  %19 = vst [vmem:[#allocation2 + $0x40] sm:$0xff] 0.0
  %20 = vst [vmem:[#allocation2 + $0x48] sm:$0xf] 0.0
  %21 = vst [vmem:[#allocation2 + $0x50] sm:$0xf] 0.0
  %22 = vst [vmem:[#allocation2 + $0x58] sm:$0xf] 0.0
  %23 = vst [vmem:[#allocation2 + $0x60] sm:$0xf] 0.0
  %24 = vst [vmem:[#allocation2 + $0x68] sm:$0xf] 0.0
  %25 = vst [vmem:[#allocation2 + $0x70] sm:$0xf] 0.0
  %26 = vst [vmem:[#allocation2 + $0x78] sm:$0xf] 0.0
  %27 = vst [vmem:[#allocation2 + $0x80] sm:$0xf] 0.0
  %28 = vst [vmem:[#allocation2 + $0x88] sm:$0xf] 0.0
  %v29 = vld [vmem:[#allocation2] sm:$0xff]
  %v30 = vld [vmem:[#allocation2 + $0x8] sm:$0xff]
  %v31 = vld [vmem:[#allocation2 + $0x48] sm:$0xf]
  %v32 = vld [vmem:[#allocation2 + $0x50] sm:$0xf]
  %v33 = vld [vmem:[%s0] sm:$0xff]
  %v34 = vld [vmem:[%s0 + $0x8] sm:$0xff]
  %v35 = vld [vmem:[%s0 + $0x80] sm:$0xf]
  %v36 = vld [vmem:[%s0 + $0x88] sm:$0xf]
  %v37 = vadd.f32 %v29, %v33
  %v38 = vadd.f32 %v30, %v34
  %v39 = vadd.f32 %v31, %v35
  %v40 = vadd.f32 %v32, %v36
  %41 = vst [vmem:[#allocation2] sm:$0xff] %v37
  %42 = vst [vmem:[#allocation2 + $0x8] sm:$0xff] %v38
  %43 = vst [vmem:[#allocation2 + $0x48] sm:$0xf] %v39
  %44 = vst [vmem:[#allocation2 + $0x50] sm:$0xf] %v40
  %v45 = vld [vmem:[#allocation2 + $0x8] sm:$0xff]
  %v46 = vld [vmem:[#allocation2 + $0x10] sm:$0xff]
  %v47 = vld [vmem:[#allocation2 + $0x50] sm:$0xf]
  %v48 = vld [vmem:[#allocation2 + $0x58] sm:$0xf]
  %v49 = vld [vmem:[%s0 + $0x10] sm:$0xff]
  %v50 = vld [vmem:[%s0 + $0x18] sm:$0xff]
  %v51 = vld [vmem:[%s0 + $0x90] sm:$0xf]
  %v52 = vld [vmem:[%s0 + $0x98] sm:$0xf]
  %v53 = vadd.f32 %v45, %v49
  %v54 = vadd.f32 %v46, %v50
  %v55 = vadd.f32 %v47, %v51
  %v56 = vadd.f32 %v48, %v52
  %57 = vst [vmem:[#allocation2 + $0x8] sm:$0xff] %v53
  %58 = vst [vmem:[#allocation2 + $0x10] sm:$0xff] %v54
  %59 = vst [vmem:[#allocation2 + $0x50] sm:$0xf] %v55
  %60 = vst [vmem:[#allocation2 + $0x58] sm:$0xf] %v56
  %v61 = vld [vmem:[#allocation2 + $0x10] sm:$0xff]
  %v62 = vld [vmem:[#allocation2 + $0x18] sm:$0xff]
  %v63 = vld [vmem:[#allocation2 + $0x58] sm:$0xf]
  %v64 = vld [vmem:[#allocation2 + $0x60] sm:$0xf]
  %v65 = vld [vmem:[%s0 + $0x20] sm:$0xff]
  %v66 = vld [vmem:[%s0 + $0x28] sm:$0xff]
  %v67 = vld [vmem:[%s0 + $0xa0] sm:$0xf]
  %v68 = vld [vmem:[%s0 + $0xa8] sm:$0xf]
  %v69 = vadd.f32 %v61, %v65
  %v70 = vadd.f32 %v62, %v66
  %v71 = vadd.f32 %v63, %v67
  %v72 = vadd.f32 %v64, %v68
  %73 = vst [vmem:[#allocation2 + $0x10] sm:$0xff] %v69
  %74 = vst [vmem:[#allocation2 + $0x18] sm:$0xff] %v70
  %75 = vst [vmem:[#allocation2 + $0x58] sm:$0xf] %v71
  %76 = vst [vmem:[#allocation2 + $0x60] sm:$0xf] %v72
  %v77 = vld [vmem:[#allocation2 + $0x18] sm:$0xff]
  %v78 = vld [vmem:[#allocation2 + $0x20] sm:$0xff]
  %v79 = vld [vmem:[#allocation2 + $0x60] sm:$0xf]
  %v80 = vld [vmem:[#allocation2 + $0x68] sm:$0xf]
  %v81 = vld [vmem:[%s0 + $0x30] sm:$0xff]
  %v82 = vld [vmem:[%s0 + $0x38] sm:$0xff]
  %v83 = vld [vmem:[%s0 + $0xb0] sm:$0xf]
  %v84 = vld [vmem:[%s0 + $0xb8] sm:$0xf]
  %v85 = vadd.f32 %v77, %v81
  %v86 = vadd.f32 %v78, %v82
  %v87 = vadd.f32 %v79, %v83
  %v88 = vadd.f32 %v80, %v84
  %89 = vst [vmem:[#allocation2 + $0x18] sm:$0xff] %v85
  %90 = vst [vmem:[#allocation2 + $0x20] sm:$0xff] %v86
  %91 = vst [vmem:[#allocation2 + $0x60] sm:$0xf] %v87
  %92 = vst [vmem:[#allocation2 + $0x68] sm:$0xf] %v88
  %v93 = vld [vmem:[#allocation2 + $0x20] sm:$0xff]
  %v94 = vld [vmem:[#allocation2 + $0x28] sm:$0xff]
  %v95 = vld [vmem:[#allocation2 + $0x68] sm:$0xf]
  %v96 = vld [vmem:[#allocation2 + $0x70] sm:$0xf]
  %v97 = vld [vmem:[%s0 + $0x40] sm:$0xff]
  %v98 = vld [vmem:[%s0 + $0x48] sm:$0xff]
  %v99 = vld [vmem:[%s0 + $0xc0] sm:$0xf]
  %v100 = vld [vmem:[%s0 + $0xc8] sm:$0xf]
  %v101 = vadd.f32 %v93, %v97
  %v102 = vadd.f32 %v94, %v98
  %v103 = vadd.f32 %v95, %v99
  %v104 = vadd.f32 %v96, %v100
  %105 = vst [vmem:[#allocation2 + $0x20] sm:$0xff] %v101
  %106 = vst [vmem:[#allocation2 + $0x28] sm:$0xff] %v102
  %107 = vst [vmem:[#allocation2 + $0x68] sm:$0xf] %v103
  %108 = vst [vmem:[#allocation2 + $0x70] sm:$0xf] %v104
  %v109 = vld [vmem:[#allocation2 + $0x28] sm:$0xff]
  %v110 = vld [vmem:[#allocation2 + $0x30] sm:$0xff]
  %v111 = vld [vmem:[#allocation2 + $0x70] sm:$0xf]
  %v112 = vld [vmem:[#allocation2 + $0x78] sm:$0xf]
  %v113 = vld [vmem:[%s0 + $0x50] sm:$0xff]
  %v114 = vld [vmem:[%s0 + $0x58] sm:$0xff]
  %v115 = vld [vmem:[%s0 + $0xd0] sm:$0xf]
  %v116 = vld [vmem:[%s0 + $0xd8] sm:$0xf]
  %v117 = vadd.f32 %v109, %v113
  %v118 = vadd.f32 %v110, %v114
  %v119 = vadd.f32 %v111, %v115
  %v120 = vadd.f32 %v112, %v116
  %121 = vst [vmem:[#allocation2 + $0x28] sm:$0xff] %v117
  %122 = vst [vmem:[#allocation2 + $0x30] sm:$0xff] %v118
  %123 = vst [vmem:[#allocation2 + $0x70] sm:$0xf] %v119
  %124 = vst [vmem:[#allocation2 + $0x78] sm:$0xf] %v120
  %v125 = vld [vmem:[#allocation2 + $0x30] sm:$0xff]
  %v126 = vld [vmem:[#allocation2 + $0x38] sm:$0xff]
  %v127 = vld [vmem:[#allocation2 + $0x78] sm:$0xf]
  %v128 = vld [vmem:[#allocation2 + $0x80] sm:$0xf]
  %v129 = vld [vmem:[%s0 + $0x60] sm:$0xff]
  %v130 = vld [vmem:[%s0 + $0x68] sm:$0xff]
  %v131 = vld [vmem:[%s0 + $0xe0] sm:$0xf]
  %v132 = vld [vmem:[%s0 + $0xe8] sm:$0xf]
  %v133 = vadd.f32 %v125, %v129
  %v134 = vadd.f32 %v126, %v130
  %v135 = vadd.f32 %v127, %v131
  %v136 = vadd.f32 %v128, %v132
  %137 = vst [vmem:[#allocation2 + $0x30] sm:$0xff] %v133
  %138 = vst [vmem:[#allocation2 + $0x38] sm:$0xff] %v134
  %139 = vst [vmem:[#allocation2 + $0x78] sm:$0xf] %v135
  %140 = vst [vmem:[#allocation2 + $0x80] sm:$0xf] %v136
  %v141 = vld [vmem:[#allocation2 + $0x38] sm:$0xff]
  %v142 = vld [vmem:[#allocation2 + $0x40] sm:$0xff]
  %v143 = vld [vmem:[#allocation2 + $0x80] sm:$0xf]
  %v144 = vld [vmem:[#allocation2 + $0x88] sm:$0xf]
  %v145 = vld [vmem:[%s0 + $0x70] sm:$0xff]
  %v146 = vld [vmem:[%s0 + $0x78] sm:$0xff]
  %v147 = vld [vmem:[%s0 + $0xf0] sm:$0xf]
  %v148 = vld [vmem:[%s0 + $0xf8] sm:$0xf]
  %v149 = vadd.f32 %v141, %v145
  %v150 = vadd.f32 %v142, %v146
  %v151 = vadd.f32 %v143, %v147
  %v152 = vadd.f32 %v144, %v148
  %153 = vst [vmem:[#allocation2 + $0x38] sm:$0xff] %v149
  %154 = vst [vmem:[#allocation2 + $0x40] sm:$0xff] %v150
  %155 = vst [vmem:[#allocation2 + $0x80] sm:$0xf] %v151
  %156 = vst [vmem:[#allocation2 + $0x88] sm:$0xf] %v152
  %v157 = vld [vmem:[#allocation2] sm:$0xff]
  %v158 = vld [vmem:[#allocation2 + $0x8] sm:$0xff]
  %v159 = vld [vmem:[#allocation2 + $0x10] sm:$0xff]
  %v160 = vld [vmem:[#allocation2 + $0x18] sm:$0xff]
  %v161 = vld [vmem:[#allocation2 + $0x20] sm:$0xff]
  %v162 = vld [vmem:[#allocation2 + $0x28] sm:$0xff]
  %v163 = vld [vmem:[#allocation2 + $0x30] sm:$0xff]
  %v164 = vld [vmem:[#allocation2 + $0x38] sm:$0xff]
  %v165 = vld [vmem:[#allocation2 + $0x40] sm:$0xff]
  %v166 = vld [vmem:[#allocation2 + $0x48] sm:$0xf]
  %v167 = vld [vmem:[#allocation2 + $0x50] sm:$0xf]
  %v168 = vld [vmem:[#allocation2 + $0x58] sm:$0xf]
  %v169 = vld [vmem:[#allocation2 + $0x60] sm:$0xf]
  %v170 = vld [vmem:[#allocation2 + $0x68] sm:$0xf]
  %v171 = vld [vmem:[#allocation2 + $0x70] sm:$0xf]
  %v172 = vld [vmem:[#allocation2 + $0x78] sm:$0xf]
  %v173 = vld [vmem:[#allocation2 + $0x80] sm:$0xf]
  %v174 = vld [vmem:[#allocation2 + $0x88] sm:$0xf]
  %v175 = vld [vmem:[%s1] sm:$0xff]
  %v176 = vld [vmem:[%s1 + $0x8] sm:$0x1]
  %v179 = vlaneseq
  %v180 = vshrl.u32 %v179, 7
  %v181 = vsub.s32 0, %v180
  %v182 = vrot.slane %v175, %v181
  %v183 = vlaneseq
  %v184 = vshrl.u32 %v183, 7
  %v185 = vsub.s32 1, %v184
  %v186 = vrot.slane %v175, %v185
  %v187 = vlaneseq
  %v188 = vshrl.u32 %v187, 7
  %v189 = vsub.s32 2, %v188
  %v190 = vrot.slane %v175, %v189
  %v191 = vlaneseq
  %v192 = vshrl.u32 %v191, 7
  %v193 = vsub.s32 3, %v192
  %v194 = vrot.slane %v175, %v193
  %v195 = vlaneseq
  %v196 = vshrl.u32 %v195, 7
  %v197 = vsub.s32 4, %v196
  %v198 = vrot.slane %v175, %v197
  %v199 = vlaneseq
  %v200 = vshrl.u32 %v199, 7
  %v201 = vsub.s32 5, %v200
  %v202 = vrot.slane %v175, %v201
  %v203 = vlaneseq
  %v204 = vshrl.u32 %v203, 7
  %v205 = vsub.s32 6, %v204
  %v206 = vrot.slane %v175, %v205
  %v207 = vlaneseq
  %v208 = vshrl.u32 %v207, 7
  %v209 = vsub.s32 7, %v208
  %v210 = vrot.slane %v175, %v209
  %v211 = vlaneseq
  %v212 = vshrl.u32 %v211, 7
  %v213 = vsub.s32 0, %v212
  %v214 = vrot.slane %v176, %v213
  %v224 = vmul.f32 %v157, %v182
  %v225 = vmul.f32 %v158, %v186
  %v226 = vmul.f32 %v159, %v190
  %v227 = vmul.f32 %v160, %v194
  %v228 = vmul.f32 %v161, %v198
  %v229 = vmul.f32 %v162, %v202
  %v230 = vmul.f32 %v163, %v206
  %v231 = vmul.f32 %v164, %v210
  %v232 = vmul.f32 %v165, %v214
  %v233 = vmul.f32 %v166, %v182
  %v234 = vmul.f32 %v167, %v186
  %v235 = vmul.f32 %v168, %v190
  %v236 = vmul.f32 %v169, %v194
  %v237 = vmul.f32 %v170, %v198
  %v238 = vmul.f32 %v171, %v202
  %v239 = vmul.f32 %v172, %v206
  %v240 = vmul.f32 %v173, %v210
  %v241 = vmul.f32 %v174, %v214
  %242 = vst [vmem:[%s2] sm:$0xff] %v224
  %243 = vst [vmem:[%s2 + $0x8] sm:$0xff] %v225
  %244 = vst [vmem:[%s2 + $0x10] sm:$0xff] %v226
  %245 = vst [vmem:[%s2 + $0x18] sm:$0xff] %v227
  %246 = vst [vmem:[%s2 + $0x20] sm:$0xff] %v228
  %247 = vst [vmem:[%s2 + $0x28] sm:$0xff] %v229
  %248 = vst [vmem:[%s2 + $0x30] sm:$0xff] %v230
  %249 = vst [vmem:[%s2 + $0x38] sm:$0xff] %v231
  %250 = vst [vmem:[%s2 + $0x40] sm:$0xff] %v232
  %251 = vst [vmem:[%s2 + $0x48] sm:$0xf] %v233
  %252 = vst [vmem:[%s2 + $0x50] sm:$0xf] %v234
  %253 = vst [vmem:[%s2 + $0x58] sm:$0xf] %v235
  %254 = vst [vmem:[%s2 + $0x60] sm:$0xf] %v236
  %255 = vst [vmem:[%s2 + $0x68] sm:$0xf] %v237
  %256 = vst [vmem:[%s2 + $0x70] sm:$0xf] %v238
  %257 = vst [vmem:[%s2 + $0x78] sm:$0xf] %v239
  %258 = vst [vmem:[%s2 + $0x80] sm:$0xf] %v240
  %259 = vst [vmem:[%s2 + $0x88] sm:$0xf] %v241
  // Predicated region
  $region10: #{torch_ola.1} parent=0 // pred_check
    _
  $region11: #{torch_ola.1} parent=0 // pred_check_branch
    %261 = sbr.rel (0) target = $region13
  $region12: #{torch_ola.1} parent=0 // pred_region
    _
  $region13: #{torch_ola.1} parent=0 // pred_fallthru
    _
  // Predicated region
  $region14: #{torch_ola.1} parent=0 // pred_check
    _
  $region15: #{torch_ola.1} parent=0 // pred_check_branch
    %263 = sbr.rel (0) target = $region17
  $region16: #{torch_ola.1} parent=0 // pred_region
    _
  $region17: #{torch_ola.1} parent=0 // pred_fallthru
    _

</llo_original>
